<compile_context>
chip_gen: v6e
topology: v6e:2x2x1
jax: 0.10.0
libtpu: 0.0.40
codegen_flags: <defaults>
</compile_context>

<pallas_src>
import functools

import jax
import jax.numpy as jnp
from jax import lax
from jax.experimental import pallas as pl
from jax.experimental.pallas import tpu as pltpu

_LANE = 128
_SUBLANE = 8
_EPS = 1e-6
_MAX_BLOCK_ROWS = 1024


def _cdiv(a, b):
    return (a + b - 1) // b


def _round_up(a, b):
    return _cdiv(a, b) * b


def _pow_by_const(x, gamma):
    """x ** gamma; repeated multiplies (VPU) for small integer gamma, pow otherwise."""
    g = float(gamma)
    if g.is_integer() and 0 <= g <= 16:
        n = int(g)
        if n == 0:
            return jnp.ones_like(x)
        acc, base = None, x
        while n:
            if n & 1:
                acc = base if acc is None else acc * base
            n >>= 1
            if n:
                base = base * base
        return acc
    return jnp.power(x, jnp.float32(g))


def _combined_loss_kernel(pred_ref, tgt_ref, out_ref, *,
                          gamma, n_valid, block_rows, hard_labels):
    c = pl.program_id(0)          # core-split axis ("parallel")
    i = pl.program_id(1)          # reduction axis ("arbitrary")

    @pl.when(i == 0)
    def _():
        out_ref[...] = jnp.zeros_like(out_ref)

    p = pred_ref[...]
    t = tgt_ref[...]

    # Global element index of every lane in this block -> tail-padding mask.
    base_row = (c * pl.num_programs(1) + i) * block_rows
    row_ids = lax.broadcasted_iota(jnp.int32, p.shape, 0)
    col_ids = lax.broadcasted_iota(jnp.int32, p.shape, 1)
    valid = (base_row + row_ids) * _LANE + col_ids < n_valid

    is_pos = t == 1.0
    pt = jnp.where(is_pos, p, 1.0 - p)
    if hard_labels:
        # Exact for {0,1} targets: collapses the two logs into one (1 EUP op/elem).
        ce = -jnp.log(pt + _EPS)
    else:
        ce = -(t * jnp.log(p + _EPS) + (1.0 - t) * jnp.log(1.0 - p + _EPS))
    fl = ce * _pow_by_const(1.0 - pt, gamma)

    zero = jnp.float32(0.0)
    # Padding invariant: pad pred = 0.5, pad target = 0.0, so only the focal
    # term and sum(pred) need explicit masking; the target-driven sums are
    # already exact over the padded tail.
    s_fl = jnp.sum(jnp.where(valid, fl, zero))
    s_pred = jnp.sum(jnp.where(valid, p, zero))
    s_inter = jnp.sum(p * t)
    s_tgt = jnp.sum(t)
    s_pos = jnp.sum(jnp.where(is_pos, 1.0, 0.0))

    # Place each partial sum on its own sublane row of this core's (8,128)
    # output block (replicated across lanes; wrapper reads lane 0).
    sub = lax.broadcasted_iota(jnp.int32, out_ref.shape, 0)
    out_ref[...] += (jnp.where(sub == 0, s_fl, zero)
                     + jnp.where(sub == 1, s_inter, zero)
                     + jnp.where(sub == 2, s_pred, zero)
                     + jnp.where(sub == 3, s_tgt, zero)
                     + jnp.where(sub == 4, s_pos, zero))


def combined_loss(pred, target, *, alpha=0.35, gamma=3.0,
                  focal_weight=0.8, dice_weight=0.2, smooth=1e-6,
                  hard_labels=True):
    """Pallas implementation of CombinedLoss.forward (returns a scalar).

    hard_labels=True assumes target values are exactly 0 or 1 (the regime the
    PyTorch module's `target == 1` branching is written for); set False for an
    exact two-log CE with soft targets.
    """
    assert pred.shape == target.shape
    n_valid = int(pred.size)

    pred_f = pred.reshape(-1).astype(jnp.float32)
    tgt_f = target.reshape(-1).astype(jnp.float32)

    # Tile-size selection: big row tiles (<= 1024 rows), rows a multiple of
    # n_splits * block_rows so the grid divides exactly.
    rows_needed = max(1, _cdiv(n_valid, _LANE))
    n_splits = 2 if rows_needed >= 2 * _SUBLANE else 1
    steps = max(1, _cdiv(rows_needed, n_splits * _MAX_BLOCK_ROWS))
    block_rows = _round_up(_cdiv(rows_needed, n_splits * steps), _SUBLANE)
    rows = n_splits * steps * block_rows

    pad = rows * _LANE - n_valid
    if pad > 0:
        # pred pad 0.5 keeps log() finite; target pad 0.0 keeps unmasked sums exact.
        pred_f = jnp.pad(pred_f, (0, pad), constant_values=0.5)
        tgt_f = jnp.pad(tgt_f, (0, pad), constant_values=0.0)

    pred_2d = pred_f.reshape(rows, _LANE)
    tgt_2d = tgt_f.reshape(rows, _LANE)

    kernel = functools.partial(
        _combined_loss_kernel, gamma=float(gamma), n_valid=n_valid,
        block_rows=block_rows, hard_labels=bool(hard_labels))

    in_spec = pl.BlockSpec((block_rows, _LANE),
                           lambda c, i: (c * steps + i, 0))

    out = pl.pallas_call(
        kernel,
        out_shape=jax.ShapeDtypeStruct((n_splits * _SUBLANE, _LANE), jnp.float32),
        grid_spec=pltpu.PrefetchScalarGridSpec(
            num_scalar_prefetch=0,
            grid=(n_splits, steps),
            in_specs=[in_spec, in_spec],
            out_specs=pl.BlockSpec((_SUBLANE, _LANE), lambda c, i: (c, 0)),
        ),
        compiler_params=pltpu.CompilerParams(
            dimension_semantics=("parallel", "arbitrary")),
    )(pred_2d, tgt_2d)

    # Combine the 5 global sums (sum partials over the core-split axis, lane 0).
    partials = out.reshape(n_splits, _SUBLANE, _LANE)[:, :, 0].sum(axis=0)
    s_fl, s_inter, s_pred, s_tgt, s_pos = (partials[0], partials[1],
                                           partials[2], partials[3], partials[4])

    n = jnp.float32(n_valid)
    focal = s_fl / n                                   # FocalLoss.forward (mean)
    frac_pos = s_pos / n
    # mean(where(t==1, a*focal, (1-a)*focal)) = focal * (a*frac_pos + (1-a)*(1-frac_pos))
    focal_weighted_mean = focal * (alpha * frac_pos + (1.0 - alpha) * (1.0 - frac_pos))
    dice = (2.0 * s_inter + smooth) / (s_pred + s_tgt + smooth)
    return focal_weight * focal_weighted_mean + dice_weight * (1.0 - dice)


def _combined_loss_ref(pred, target, alpha=0.35, gamma=3.0,
                       focal_weight=0.8, dice_weight=0.2, smooth=1e-6):
    """Direct JAX translation of the PyTorch CombinedLoss.forward."""
    ce = -(target * jnp.log(pred + _EPS)
           + (1.0 - target) * jnp.log(1.0 - pred + _EPS))
    pt = jnp.where(target == 1.0, pred, 1.0 - pred)
    focal = jnp.mean(ce * (1.0 - pt) ** gamma)
    focal_weighted = jnp.where(target == 1.0, alpha * focal, (1.0 - alpha) * focal)
    intersection = jnp.sum(pred * target)
    union = jnp.sum(pred) + jnp.sum(target)
    dice = (2.0 * intersection + smooth) / (union + smooth)
    return focal_weight * jnp.mean(focal_weighted) + dice_weight * (1.0 - dice)


if __name__ == "__main__":
    key = jax.random.PRNGKey(0)
    kp, kt = jax.random.split(key)
    # NCHW, batch=2, channels=4, spatial=16x16; pred in (0,1), target in {0,1}.
    shape = (2, 4, 16, 16)
    pred = jax.random.uniform(kp, shape, dtype=jnp.float32,
                              minval=0.01, maxval=0.99)
    target = (jax.random.uniform(kt, shape, dtype=jnp.float32) > 0.5
              ).astype(jnp.float32)

    out = combined_loss(pred, target)
    out = jax.block_until_ready(out)

    ref = _combined_loss_ref(pred, target)
    assert jnp.allclose(out, ref, rtol=1e-4, atol=1e-6), (out, ref)
    print("KERNEL_OK")
</pallas_src>

<mosaic_0001>
module attributes {stable_mosaic.version = 11 : i64} {
  func.func @_combined_loss_kernel(%arg0: i32, %arg1: i32, %arg2: memref<8x128xf32, #tpu.memory_space<vmem>>, %arg3: memref<8x128xf32, #tpu.memory_space<vmem>>, %arg4: memref<8x128xf32, #tpu.memory_space<vmem>>) attributes {dimension_semantics = [#tpu.dimension_semantics<parallel>, #tpu.dimension_semantics<arbitrary>], iteration_bounds = array<i64: 2, 1>, scalar_prefetch = 0 : i64, scratch_operands = 0 : i64, tpu.core_type = #tpu.core_type<tc>, window_params = [{transform_indices = @transform_0, window_bounds = array<i64: 8, 128>}, {transform_indices = @transform_1, window_bounds = array<i64: 8, 128>}, {transform_indices = @transform_2, window_bounds = array<i64: 8, 128>}]} {
    %c0_i32 = arith.constant 0 : i32
    %0 = arith.cmpi eq, %arg1, %c0_i32 : i32
    %1 = arith.extui %0 : i1 to i32
    %c0_i32_0 = arith.constant 0 : i32
    %2 = arith.cmpi ne, %1, %c0_i32_0 : i32
    scf.if %2 {
      %cst_28 = arith.constant 0.000000e+00 : f32
      %93 = vector.broadcast %cst_28 : f32 to vector<8x128xf32>
      %c0_29 = arith.constant 0 : index
      %c0_30 = arith.constant 0 : index
      %94 = vector.load %arg4[%c0_29, %c0_30] : memref<8x128xf32, #tpu.memory_space<vmem>>, vector<8x128xf32>
      tpu.vector_store %arg4[%c0_29, %c0_30], %93 {strides = array<i32>} : memref<8x128xf32, #tpu.memory_space<vmem>>, vector<8x128xf32>,
    } else {
    }
    %c0 = arith.constant 0 : index
    %c0_1 = arith.constant 0 : index
    %3 = vector.load %arg2[%c0, %c0_1] : memref<8x128xf32, #tpu.memory_space<vmem>>, vector<8x128xf32>
    %c0_2 = arith.constant 0 : index
    %c0_3 = arith.constant 0 : index
    %4 = vector.load %arg3[%c0_2, %c0_3] : memref<8x128xf32, #tpu.memory_space<vmem>>, vector<8x128xf32>
    %c1_i32 = arith.constant 1 : i32
    %5 = arith.muli %arg0, %c1_i32 : i32
    %6 = arith.addi %5, %arg1 : i32
    %c8_i32 = arith.constant 8 : i32
    %7 = arith.muli %6, %c8_i32 : i32
    %8 = tpu.iota {dimensions = array<i32: 0>} : vector<8x128xi32>
    %9 = tpu.iota {dimensions = array<i32: 1>} : vector<8x128xi32>
    %10 = vector.broadcast %7 : i32 to vector<8x128xi32>
    %11 = arith.addi %10, %8 : vector<8x128xi32>
    %c128_i32 = arith.constant 128 : i32
    %12 = vector.broadcast %c128_i32 : i32 to vector<8x128xi32>
    %13 = arith.muli %11, %12 : vector<8x128xi32>
    %14 = arith.addi %13, %9 : vector<8x128xi32>
    %c2048_i32 = arith.constant 2048 : i32
    %15 = vector.broadcast %c2048_i32 : i32 to vector<8x128xi32>
    %16 = arith.cmpi slt, %14, %15 : vector<8x128xi32>
    %cst = arith.constant 1.000000e+00 : f32
    %17 = vector.broadcast %cst : f32 to vector<8x128xf32>
    %18 = arith.cmpf oeq, %4, %17 : vector<8x128xf32>
    %cst_4 = arith.constant 1.000000e+00 : f32
    %19 = vector.broadcast %cst_4 : f32 to vector<8x128xf32>
    %20 = arith.subf %19, %3 : vector<8x128xf32>
    %21 = arith.select %18, %3, %20 : vector<8x128xi1>, vector<8x128xf32>
    %cst_5 = arith.constant 9.99999997E-7 : f32
    %22 = vector.broadcast %cst_5 : f32 to vector<8x128xf32>
    %23 = arith.addf %21, %22 : vector<8x128xf32>
    %24 = math.log %23 : vector<8x128xf32>
    %cst_6 = arith.constant 0.000000e+00 : f32
    %25 = vector.broadcast %cst_6 : f32 to vector<8x128xf32>
    %26 = arith.subf %25, %24 : vector<8x128xf32>
    %cst_7 = arith.constant 1.000000e+00 : f32
    %27 = vector.broadcast %cst_7 : f32 to vector<8x128xf32>
    %28 = arith.subf %27, %21 : vector<8x128xf32>
    %29 = arith.mulf %28, %28 : vector<8x128xf32>
    %30 = arith.mulf %28, %29 : vector<8x128xf32>
    %31 = arith.mulf %26, %30 : vector<8x128xf32>
    %cst_8 = arith.constant 0.000000e+00 : f32
    %32 = vector.broadcast %cst_8 : f32 to vector<8x128xf32>
    %33 = arith.select %16, %31, %32 : vector<8x128xi1>, vector<8x128xf32>
    %34 = vector.shape_cast %33 : vector<8x128xf32> to vector<1x8x128xf32>
    %cst_9 = arith.constant dense<0.000000e+00> : vector<1xf32>
    %35 = vector.multi_reduction <add>, %34, %cst_9 [1, 2] : vector<1x8x128xf32> to vector<1xf32>
    %36 = vector.shape_cast %35 : vector<1xf32> to vector<1x1x1xf32>
    %37 = vector.extract %36[0, 0, 0] : f32 from vector<1x1x1xf32>
    %cst_10 = arith.constant 0.000000e+00 : f32
    %38 = vector.broadcast %cst_10 : f32 to vector<8x128xf32>
    %39 = arith.select %16, %3, %38 : vector<8x128xi1>, vector<8x128xf32>
    %40 = vector.shape_cast %39 : vector<8x128xf32> to vector<1x8x128xf32>
    %cst_11 = arith.constant dense<0.000000e+00> : vector<1xf32>
    %41 = vector.multi_reduction <add>, %40, %cst_11 [1, 2] : vector<1x8x128xf32> to vector<1xf32>
    %42 = vector.shape_cast %41 : vector<1xf32> to vector<1x1x1xf32>
    %43 = vector.extract %42[0, 0, 0] : f32 from vector<1x1x1xf32>
    %44 = arith.mulf %3, %4 : vector<8x128xf32>
    %45 = vector.shape_cast %44 : vector<8x128xf32> to vector<1x8x128xf32>
    %cst_12 = arith.constant dense<0.000000e+00> : vector<1xf32>
    %46 = vector.multi_reduction <add>, %45, %cst_12 [1, 2] : vector<1x8x128xf32> to vector<1xf32>
    %47 = vector.shape_cast %46 : vector<1xf32> to vector<1x1x1xf32>
    %48 = vector.extract %47[0, 0, 0] : f32 from vector<1x1x1xf32>
    %49 = vector.shape_cast %4 : vector<8x128xf32> to vector<1x8x128xf32>
    %cst_13 = arith.constant dense<0.000000e+00> : vector<1xf32>
    %50 = vector.multi_reduction <add>, %49, %cst_13 [1, 2] : vector<1x8x128xf32> to vector<1xf32>
    %51 = vector.shape_cast %50 : vector<1xf32> to vector<1x1x1xf32>
    %52 = vector.extract %51[0, 0, 0] : f32 from vector<1x1x1xf32>
    %cst_14 = arith.constant 1.000000e+00 : f32
    %cst_15 = arith.constant 0.000000e+00 : f32
    %53 = vector.broadcast %cst_14 : f32 to vector<8x128xf32>
    %54 = vector.broadcast %cst_15 : f32 to vector<8x128xf32>
    %55 = arith.select %18, %53, %54 : vector<8x128xi1>, vector<8x128xf32>
    %56 = vector.shape_cast %55 : vector<8x128xf32> to vector<1x8x128xf32>
    %cst_16 = arith.constant dense<0.000000e+00> : vector<1xf32>
    %57 = vector.multi_reduction <add>, %56, %cst_16 [1, 2] : vector<1x8x128xf32> to vector<1xf32>
    %58 = vector.shape_cast %57 : vector<1xf32> to vector<1x1x1xf32>
    %59 = vector.extract %58[0, 0, 0] : f32 from vector<1x1x1xf32>
    %60 = tpu.iota {dimensions = array<i32: 0>} : vector<8x128xi32>
    %c0_17 = arith.constant 0 : index
    %c0_18 = arith.constant 0 : index
    %61 = vector.load %arg4[%c0_17, %c0_18] : memref<8x128xf32, #tpu.memory_space<vmem>>, vector<8x128xf32>
    %c0_i32_19 = arith.constant 0 : i32
    %62 = vector.broadcast %c0_i32_19 : i32 to vector<8x128xi32>
    %63 = arith.cmpi eq, %60, %62 : vector<8x128xi32>
    %cst_20 = arith.constant 0.000000e+00 : f32
    %64 = vector.broadcast %37 : f32 to vector<8x128xf32>
    %65 = vector.broadcast %cst_20 : f32 to vector<8x128xf32>
    %66 = arith.select %63, %64, %65 : vector<8x128xi1>, vector<8x128xf32>
    %c1_i32_21 = arith.constant 1 : i32
    %67 = vector.broadcast %c1_i32_21 : i32 to vector<8x128xi32>
    %68 = arith.cmpi eq, %60, %67 : vector<8x128xi32>
    %cst_22 = arith.constant 0.000000e+00 : f32
    %69 = vector.broadcast %48 : f32 to vector<8x128xf32>
    %70 = vector.broadcast %cst_22 : f32 to vector<8x128xf32>
    %71 = arith.select %68, %69, %70 : vector<8x128xi1>, vector<8x128xf32>
    %72 = arith.addf %66, %71 : vector<8x128xf32>
    %c2_i32 = arith.constant 2 : i32
    %73 = vector.broadcast %c2_i32 : i32 to vector<8x128xi32>
    %74 = arith.cmpi eq, %60, %73 : vector<8x128xi32>
    %cst_23 = arith.constant 0.000000e+00 : f32
    %75 = vector.broadcast %43 : f32 to vector<8x128xf32>
    %76 = vector.broadcast %cst_23 : f32 to vector<8x128xf32>
    %77 = arith.select %74, %75, %76 : vector<8x128xi1>, vector<8x128xf32>
    %78 = arith.addf %72, %77 : vector<8x128xf32>
    %c3_i32 = arith.constant 3 : i32
    %79 = vector.broadcast %c3_i32 : i32 to vector<8x128xi32>
    %80 = arith.cmpi eq, %60, %79 : vector<8x128xi32>
    %cst_24 = arith.constant 0.000000e+00 : f32
    %81 = vector.broadcast %52 : f32 to vector<8x128xf32>
    %82 = vector.broadcast %cst_24 : f32 to vector<8x128xf32>
    %83 = arith.select %80, %81, %82 : vector<8x128xi1>, vector<8x128xf32>
    %84 = arith.addf %78, %83 : vector<8x128xf32>
    %c4_i32 = arith.constant 4 : i32
    %85 = vector.broadcast %c4_i32 : i32 to vector<8x128xi32>
    %86 = arith.cmpi eq, %60, %85 : vector<8x128xi32>
    %cst_25 = arith.constant 0.000000e+00 : f32
    %87 = vector.broadcast %59 : f32 to vector<8x128xf32>
    %88 = vector.broadcast %cst_25 : f32 to vector<8x128xf32>
    %89 = arith.select %86, %87, %88 : vector<8x128xi1>, vector<8x128xf32>
    %90 = arith.addf %84, %89 : vector<8x128xf32>
    %91 = arith.addf %61, %90 : vector<8x128xf32>
    %c0_26 = arith.constant 0 : index
    %c0_27 = arith.constant 0 : index
    %92 = vector.load %arg4[%c0_26, %c0_27] : memref<8x128xf32, #tpu.memory_space<vmem>>, vector<8x128xf32>
    tpu.vector_store %arg4[%c0_26, %c0_27], %91 {strides = array<i32>} : memref<8x128xf32, #tpu.memory_space<vmem>>, vector<8x128xf32>,
    return
  }
  func.func @transform_0(%arg0: i32, %arg1: i32) -> (i32, i32) {
    %c1_i32 = arith.constant 1 : i32
    %0 = arith.muli %arg0, %c1_i32 : i32
    %1 = arith.addi %0, %arg1 : i32
    %c0_i32 = arith.constant 0 : i32
    %c0_i32_0 = arith.constant 0 : i32
    return %1, %c0_i32 : i32, i32
  }
  func.func @transform_1(%arg0: i32, %arg1: i32) -> (i32, i32) {
    %c1_i32 = arith.constant 1 : i32
    %0 = arith.muli %arg0, %c1_i32 : i32
    %1 = arith.addi %0, %arg1 : i32
    %c0_i32 = arith.constant 0 : i32
    %c0_i32_0 = arith.constant 0 : i32
    return %1, %c0_i32 : i32, i32
  }
  func.func @transform_2(%arg0: i32, %arg1: i32) -> (i32, i32) {
    %c0_i32 = arith.constant 0 : i32
    %c0_i32_0 = arith.constant 0 : i32
    return %arg0, %c0_i32 : i32, i32
  }
}

</mosaic_0001>

<llo_original>
// kernel: tpu_custom_call.1
$region0: #{tpu_custom_call.1}
  #allocation0 [shape = 'u32[]', space=smem, size = 0x4, offset = 0x4, fixed_abs, tag = 'smem constant byte address 0x4 - core index']
  #allocation1 [shape = 'u32[144,128]{1,0:T(1,128)}', space=vmem, size = 0x12000, scoped, tag = 'internal scratch']
  %s0 = inlined_call_operand.hbm [shape: f32[16,128], index: 0, kind: input, shape index: {}]
  %s1 = inlined_call_operand.hbm [shape: f32[16,128], index: 1, kind: input, shape index: {}]
  %s2 = inlined_call_operand.hbm [shape: f32[16,128], index: 2, kind: output, shape index: {}]
  %s3 = sld [smem:[#allocation0]]
  $region53: #{tpu_custom_call.1} parent=0
    _
  %s5 = ssub.s32 1, %s3
  %s6 = scalar_select 0, %s5, %s3
  $region1: #{tpu_custom_call.1} parent=0
    #allocation2 [shape = 'u8[8192]{0}', space=vmem, size = 0x2000, scoped, tag = 'input window, operand 0']
    #allocation3 [shape = 's32[2]{0}', space=sflag, size = 0x8, scoped, tag = 'scoped memory for tpu_custom_call.1']
    #allocation4 [shape = 's32[2]{0}', space=sflag, size = 0x8, scoped, tag = 'scoped memory for tpu_custom_call.1']
    #allocation5 [shape = 'u8[8192]{0}', space=vmem, size = 0x2000, scoped, tag = 'input window, operand 1']
    #allocation6 [shape = 's32[2]{0}', space=sflag, size = 0x8, scoped, tag = 'scoped memory for tpu_custom_call.1']
    #allocation7 [shape = 'u8[8192]{0}', space=vmem, size = 0x2000, scoped, tag = 'output window, operand 0']
    %7 = vsyncpa [#allocation3], 0
    %s8 = scalar_lea.sflag [#allocation3], 1
    %9 = vsyncpa %s8, 0
    %10 = vsyncpa [#allocation6], 0
    %s11 = scalar_lea.sflag [#allocation6], 1
    %12 = vsyncpa %s11, 0
    %13 = vsyncpa [#allocation4], 0
    %s14 = scalar_lea.sflag [#allocation4], 1
    %15 = vsyncpa %s14, 0
    loop: start=0, step=1, limit=4
    $region2: #{tpu_custom_call.1} parent=1 // loop_pre_header
      _
    $region3: #{tpu_custom_call.1} parent=1 // loop_header
      %s17 = sphi 0, %s21
      %p18 = scmp.ge.s32.totalorder %s17, 4
      %s24 = sphi 0, %s36
      %s25 = sphi 0, %s32
      %s26 = sphi 0, %s24
      %s27 = sphi 0, %s25
      %s28 = sphi 0, %s26
      %s29 = sphi 0, %s27
      %s41 = sphi 0, %s43
      %s44 = sphi 0, %s41
      %s45 = sphi 0, %s44
      %s61 = sphi 0, %s45
      %s69 = sphi 0, %s71
      %s72 = sphi 0, %s69
      %s73 = sphi 0, %s72
      %s89 = sphi 0, %s73
      %s95 = sphi 0, %s97
      %s98 = sphi 0, %s95
      %s99 = sphi 0, %s98
      %s115 = sphi 0, %s99
    $region4: #{tpu_custom_call.1} parent=1 // loop_header_branch
      %20 = sbr.rel (%p18) target = $region8
    $region5: #{tpu_custom_call.1} parent=1 // loop_body
      %s22 = ssub.s32 %s17, 1
      %s23 = ssub.s32 %s17, 2
      %s30 = sadd.s32 1, %s25
      %p31 = scmp.ge.s32.totalorder %s30, 1
      %s32 = scalar_select %p31, 0, %s30
      %s33 = sadd.s32 1, %s24
      %s34 = scalar_select %p31, %s33, %s24
      %p35 = scmp.ge.s32.totalorder %s34, 2
      %s36 = scalar_select %p35, 0, %s34
      %s37 = sadd.s32 %s24, %s25
      %s38 = sadd.s32 %s36, %s32
      %s39 = ssub.s32 %s37, %s38
      %p40 = scmp.eq.s32.totalorder %s39, 0
      %s42 = sadd.s32 %s41, 1
      %s43 = scalar_select %p40, %s41, %s42
      %p46 = pneg %p40
      %p47 = scmp.eq.s32.totalorder %s17, 1
      %p48 = por %p46, %p47
      %p49 = scmp.ne.s32.totalorder %s41, %s44
      %p50 = scmp.eq.s32.totalorder %s17, 0
      %p51 = por %p49, %p50
      %p52 = scmp.ne.s32.totalorder %s41, %s44
      %p53 = scmp.eq.s32.totalorder %s22, 1
      %p54 = por %p52, %p53
      %p55 = scmp.ne.s32.totalorder %s44, %s45
      %p56 = scmp.eq.s32.totalorder %s22, 0
      %p57 = por %p55, %p56
      %p58 = scmp.ne.s32.totalorder %s44, %s45
      %p59 = scmp.eq.s32.totalorder %s23, 1
      %p60 = por %p58, %p59
      %p62 = scmp.ne.s32.totalorder %s45, %s61
      %p63 = scmp.eq.s32.totalorder %s23, 0
      %p64 = por %p62, %p63
      %s65 = sadd.s32 %s24, %s25
      %s66 = sadd.s32 %s36, %s32
      %s67 = ssub.s32 %s65, %s66
      %p68 = scmp.eq.s32.totalorder %s67, 0
      %s70 = sadd.s32 %s69, 1
      %s71 = scalar_select %p68, %s69, %s70
      %p74 = pneg %p68
      %p75 = scmp.eq.s32.totalorder %s17, 1
      %p76 = por %p74, %p75
      %p77 = scmp.ne.s32.totalorder %s69, %s72
      %p78 = scmp.eq.s32.totalorder %s17, 0
      %p79 = por %p77, %p78
      %p80 = scmp.ne.s32.totalorder %s69, %s72
      %p81 = scmp.eq.s32.totalorder %s22, 1
      %p82 = por %p80, %p81
      %p83 = scmp.ne.s32.totalorder %s72, %s73
      %p84 = scmp.eq.s32.totalorder %s22, 0
      %p85 = por %p83, %p84
      %p86 = scmp.ne.s32.totalorder %s72, %s73
      %p87 = scmp.eq.s32.totalorder %s23, 1
      %p88 = por %p86, %p87
      %p90 = scmp.ne.s32.totalorder %s73, %s89
      %p91 = scmp.eq.s32.totalorder %s23, 0
      %p92 = por %p90, %p91
      %s93 = ssub.s32 %s24, %s36
      %p94 = scmp.eq.s32.totalorder %s93, 0
      %s96 = sadd.s32 %s95, 1
      %s97 = scalar_select %p94, %s95, %s96
      %p100 = pneg %p94
      %p101 = scmp.eq.s32.totalorder %s17, 1
      %p102 = por %p100, %p101
      %p103 = scmp.ne.s32.totalorder %s95, %s98
      %p104 = scmp.eq.s32.totalorder %s17, 0
      %p105 = por %p103, %p104
      %p106 = scmp.ne.s32.totalorder %s95, %s98
      %p107 = scmp.eq.s32.totalorder %s22, 1
      %p108 = por %p106, %p107
      %p109 = scmp.ne.s32.totalorder %s98, %s99
      %p110 = scmp.eq.s32.totalorder %s22, 0
      %p111 = por %p109, %p110
      %p112 = scmp.ne.s32.totalorder %s98, %s99
      %p113 = scmp.eq.s32.totalorder %s23, 1
      %p114 = por %p112, %p113
      %p116 = scmp.ne.s32.totalorder %s99, %s115
      %p117 = scmp.eq.s32.totalorder %s23, 0
      %p118 = por %p116, %p117
      %p119 = scmp.le.s32.totalorder 1, %s17
      %p120 = scmp.lt.s32.totalorder %s17, 3
      %p121 = pnand %p119, %p120
      %p122 = pneg %p121
      // Predicated region
      $region9: #{tpu_custom_call.1} parent=5 // pred_check
        _
      $region10: #{tpu_custom_call.1} parent=5 // pred_check_branch
        %124 = sbr.rel (%p121) target = $region12
      $region11: #{tpu_custom_call.1} parent=5 // pred_region
        %s125 = ssub.s32 %s17, 1
      $region12: #{tpu_custom_call.1} parent=5 // pred_fallthru
        _
      %p126 = scmp.lt.s32.totalorder %s17, 2
      // Predicated region
      $region13: #{tpu_custom_call.1} parent=5 // pred_check
        %p127 = pneg %p126
      $region14: #{tpu_custom_call.1} parent=5 // pred_check_branch
        %129 = sbr.rel (%p127) target = $region16
      $region15: #{tpu_custom_call.1} parent=5 // pred_region
        // Predicated region
        $region17: #{tpu_custom_call.1} parent=15 // pred_check
          %p130 = pneg %p51
        $region18: #{tpu_custom_call.1} parent=15 // pred_check_branch
          %132 = sbr.rel (%p130) target = $region20
        $region19: #{tpu_custom_call.1} parent=15 // pred_region
          %s133 = sand.u32 %s41, 1
          %s134 = scalar_lea.sflag [#allocation3], %s133
          %s135 = sand.u32 %s41, 1
          %s136 = smul.addr %s135, 8
          %s137 = scalar_lea.vmem [#allocation2], %s136
          %s138 = sadd.s32 %s24, %s25
          %s140 = ssub.s32 128, 128
          %141 = vsyncadd %s134, %s140
          %s142 = smul.addr %s138, 128
          %s143 = scalar_lea.hbm %s0, %s142
          %s145 = sshll.u32 %s137, 4
          %s146 = int_to_ptr.vmem [resolvable:$true] %s145
          %148 = dma.hbm_to_vmem [thread:$0]  %s143, 128, %s146, %s134
        $region20: #{tpu_custom_call.1} parent=15 // pred_fallthru
          _
        // Predicated region
        $region21: #{tpu_custom_call.1} parent=15 // pred_check
          %p149 = pneg %p79
        $region22: #{tpu_custom_call.1} parent=15 // pred_check_branch
          %151 = sbr.rel (%p149) target = $region24
        $region23: #{tpu_custom_call.1} parent=15 // pred_region
          %s152 = sand.u32 %s69, 1
          %s153 = scalar_lea.sflag [#allocation6], %s152
          %s154 = sand.u32 %s69, 1
          %s155 = smul.addr %s154, 8
          %s156 = scalar_lea.vmem [#allocation5], %s155
          %s157 = sadd.s32 %s24, %s25
          %s159 = ssub.s32 128, 128
          %160 = vsyncadd %s153, %s159
          %s161 = smul.addr %s157, 128
          %s162 = scalar_lea.hbm %s1, %s161
          %s164 = sshll.u32 %s156, 4
          %s165 = int_to_ptr.vmem [resolvable:$true] %s164
          %167 = dma.hbm_to_vmem [thread:$0]  %s162, 128, %s165, %s153
        $region24: #{tpu_custom_call.1} parent=15 // pred_fallthru
          _
      $region16: #{tpu_custom_call.1} parent=5 // pred_fallthru
        _
      %p168 = scmp.le.s32.totalorder 1, %s17
      %p169 = scmp.lt.s32.totalorder %s17, 3
      %p170 = pnand %p168, %p169
      %p171 = pneg %p170
      // Predicated region
      $region25: #{tpu_custom_call.1} parent=5 // pred_check
        _
      $region26: #{tpu_custom_call.1} parent=5 // pred_check_branch
        %173 = sbr.rel (%p170) target = $region28
      $region27: #{tpu_custom_call.1} parent=5 // pred_region
        %s174 = ssub.s32 %s17, 1
        %s175 = sand.u32 %s44, 1
        %s176 = scalar_lea.sflag [#allocation3], %s175
        %s177 = sand.u32 %s44, 1
        %s178 = smul.addr %s177, 8
        %s179 = scalar_lea.vmem [#allocation2], %s178
        // Predicated region
        $region29: #{tpu_custom_call.1} parent=27 // pred_check
          %p180 = pneg %p57
        $region30: #{tpu_custom_call.1} parent=27 // pred_check_branch
          %182 = sbr.rel (%p180) target = $region32
        $region31: #{tpu_custom_call.1} parent=27 // pred_region
          %183 = dma.done %s176, 128
        $region32: #{tpu_custom_call.1} parent=27 // pred_fallthru
          _
        %s184 = sand.u32 %s72, 1
        %s185 = scalar_lea.sflag [#allocation6], %s184
        %s186 = sand.u32 %s72, 1
        %s187 = smul.addr %s186, 8
        %s188 = scalar_lea.vmem [#allocation5], %s187
        // Predicated region
        $region33: #{tpu_custom_call.1} parent=27 // pred_check
          %p189 = pneg %p85
        $region34: #{tpu_custom_call.1} parent=27 // pred_check_branch
          %191 = sbr.rel (%p189) target = $region36
        $region35: #{tpu_custom_call.1} parent=27 // pred_region
          %192 = dma.done %s185, 128
        $region36: #{tpu_custom_call.1} parent=27 // pred_fallthru
          _
        %s193 = sand.u32 %s44, 1
        %s194 = scalar_lea.sflag [#allocation3], %s193
        %s195 = sand.u32 %s44, 1
        %s196 = smul.addr %s195, 8
        %s197 = scalar_lea.vmem [#allocation2], %s196
        %p198 = pneg %p57
        %p199 = pneg %p54
        %s200 = sand.u32 %s72, 1
        %s201 = scalar_lea.sflag [#allocation6], %s200
        %s202 = sand.u32 %s72, 1
        %s203 = smul.addr %s202, 8
        %s204 = scalar_lea.vmem [#allocation5], %s203
        %p205 = pneg %p85
        %p206 = pneg %p82
        %p207 = pneg %p111
        %p208 = pneg %p108
        %s209 = sand.u32 %s98, 1
        %s210 = scalar_lea.sflag [#allocation4], %s209
        %s211 = sand.u32 %s98, 1
        %s212 = smul.addr %s211, 8
        %s213 = scalar_lea.vmem [#allocation7], %s212
        %s214 = sadd.s32 %s26, %s27
        %s215 = sadd.s32 %s26, %s27
        %p216 = scmp.eq.s32.totalorder %s27, 0
        // Predicated region
        $region37: #{tpu_custom_call.1} parent=27 // pred_check
          %p217 = pneg %p216
        $region38: #{tpu_custom_call.1} parent=27 // pred_check_branch
          %219 = sbr.rel (%p217) target = $region40
        $region39: #{tpu_custom_call.1} parent=27 // pred_region
          %220 = vst [vmem:[%s213] sm:$0xff] 0.0
        $region40: #{tpu_custom_call.1} parent=27 // pred_fallthru
          _
        %v221 = vld [vmem:[%s179] sm:$0xff]
        %v222 = vld [vmem:[%s188] sm:$0xff]
        %s223 = sadd.s32 %s26, %s27
        %s224 = smul.u32 %s223, 8
        %v225 = vlaneseq
        %v226 = vshrl.u32 %v225, 7
        %v227 = vlaneseq
        %v228 = vand.u32 %v227, 127
        %v229 = vstv %s224
        %v230 = vadd.s32 %v229, %v226
        %v231 = vmul.u32 %v230, 128
        %v232 = vadd.s32 %v231, %v228
        %vm233 = vcmp.lt.s32.totalorder %v232, 2048
        %vm234 = vcmp.eq.f32.partialorder %v222, 1.0
        %v235 = vsub.f32 1.0, %v221
        %v236 = vsel %vm234, %v221, %v235
        %v237 = vadd.f32 %v236, 1e-06
        %v238 = vlog2.pop %v237
        %v239 = vmul.f32 %v238, 0.6931472
        %v240 = vsub.f32 0.0, %v239
        %v241 = vsub.f32 1.0, %v236
        %v242 = vmul.f32 %v241, %v241
        %v243 = vmul.f32 %v241, %v242
        %v244 = vmul.f32 %v240, %v243
        %v245 = vsel %vm233, %v244, 0.0
        %246 = vadd.xlane.f32.xlu0 %v245
        %v247 = vpop.xlane.xlu0 %246
        %v248 = vrot.slane %v247, 4
        %v249 = vadd.f32 %v247, %v248
        %v250 = vrot.slane %v249, 2
        %v251 = vadd.f32 %v249, %v250
        %v252 = vrot.slane %v251, 1
        %v253 = vadd.f32 %v251, %v252
        %s254 = vtos %v253
        %v255 = vsel %vm233, %v221, 0.0
        %256 = vadd.xlane.f32.xlu0 %v255
        %v257 = vpop.xlane.xlu0 %256
        %v258 = vrot.slane %v257, 4
        %v259 = vadd.f32 %v257, %v258
        %v260 = vrot.slane %v259, 2
        %v261 = vadd.f32 %v259, %v260
        %v262 = vrot.slane %v261, 1
        %v263 = vadd.f32 %v261, %v262
        %s264 = vtos %v263
        %v265 = vmul.f32 %v221, %v222
        %266 = vadd.xlane.f32.xlu0 %v265
        %v267 = vpop.xlane.xlu0 %266
        %v268 = vrot.slane %v267, 4
        %v269 = vadd.f32 %v267, %v268
        %v270 = vrot.slane %v269, 2
        %v271 = vadd.f32 %v269, %v270
        %v272 = vrot.slane %v271, 1
        %v273 = vadd.f32 %v271, %v272
        %s274 = vtos %v273
        %275 = vadd.xlane.f32.xlu0 %v222
        %v276 = vpop.xlane.xlu0 %275
        %v277 = vrot.slane %v276, 4
        %v278 = vadd.f32 %v276, %v277
        %v279 = vrot.slane %v278, 2
        %v280 = vadd.f32 %v278, %v279
        %v281 = vrot.slane %v280, 1
        %v282 = vadd.f32 %v280, %v281
        %s283 = vtos %v282
        %v284 = vsel %vm234, 1.0, 0.0
        %285 = vadd.xlane.f32.xlu0 %v284
        %v286 = vpop.xlane.xlu0 %285
        %v287 = vrot.slane %v286, 4
        %v288 = vadd.f32 %v286, %v287
        %v289 = vrot.slane %v288, 2
        %v290 = vadd.f32 %v288, %v289
        %v291 = vrot.slane %v290, 1
        %v292 = vadd.f32 %v290, %v291
        %s293 = vtos %v292
        %v294 = vld [vmem:[%s213] sm:$0xff]
        %vm295 = vcmp.eq.s32.totalorder %v226, 0
        %v296 = vstv %s254
        %v297 = vsel %vm295, %v296, 0.0
        %vm298 = vcmp.eq.s32.totalorder %v226, 1
        %v299 = vstv %s274
        %v300 = vsel %vm298, %v299, 0.0
        %v301 = vadd.f32 %v297, %v300
        %vm302 = vcmp.eq.s32.totalorder %v226, 2
        %v303 = vstv %s264
        %v304 = vsel %vm302, %v303, 0.0
        %v305 = vadd.f32 %v301, %v304
        %vm306 = vcmp.eq.s32.totalorder %v226, 3
        %v307 = vstv %s283
        %v308 = vsel %vm306, %v307, 0.0
        %v309 = vadd.f32 %v305, %v308
        %vm310 = vcmp.eq.s32.totalorder %v226, 4
        %v311 = vstv %s293
        %v312 = vsel %vm310, %v311, 0.0
        %v313 = vadd.f32 %v309, %v312
        %v314 = vadd.f32 %v294, %v313
        %315 = vst [vmem:[%s213] sm:$0xff] %v314
        %s316 = sand.u32 %s98, 1
        %s317 = scalar_lea.sflag [#allocation4], %s316
        %s318 = sand.u32 %s98, 1
        %s319 = smul.addr %s318, 8
        %s320 = scalar_lea.vmem [#allocation7], %s319
        // Predicated region
        $region41: #{tpu_custom_call.1} parent=27 // pred_check
          %p321 = pneg %p108
        $region42: #{tpu_custom_call.1} parent=27 // pred_check_branch
          %323 = sbr.rel (%p321) target = $region44
        $region43: #{tpu_custom_call.1} parent=27 // pred_region
          %s325 = ssub.s32 128, 128
          %326 = vsyncadd %s317, %s325
          %s327 = smul.addr %s26, 128
          %s328 = scalar_lea.hbm %s2, %s327
          %s330 = sshll.u32 %s320, 4
          %s331 = int_to_ptr.vmem [resolvable:$true] %s330
          %333 = dma.vmem_to_hbm [thread:$0]  %s331, 128, %s328, %s317
        $region44: #{tpu_custom_call.1} parent=27 // pred_fallthru
          _
      $region28: #{tpu_custom_call.1} parent=5 // pred_fallthru
        _
      %p334 = scmp.le.s32.totalorder 2, %s17
      // Predicated region
      $region45: #{tpu_custom_call.1} parent=5 // pred_check
        %p335 = pneg %p334
      $region46: #{tpu_custom_call.1} parent=5 // pred_check_branch
        %337 = sbr.rel (%p335) target = $region48
      $region47: #{tpu_custom_call.1} parent=5 // pred_region
        %s338 = ssub.s32 %s17, 2
        // Predicated region
        $region49: #{tpu_custom_call.1} parent=47 // pred_check
          %p339 = pneg %p114
        $region50: #{tpu_custom_call.1} parent=47 // pred_check_branch
          %341 = sbr.rel (%p339) target = $region52
        $region51: #{tpu_custom_call.1} parent=47 // pred_region
          %s342 = sand.u32 %s99, 1
          %s343 = scalar_lea.sflag [#allocation4], %s342
          %s344 = sand.u32 %s99, 1
          %s345 = smul.addr %s344, 8
          %s346 = scalar_lea.vmem [#allocation7], %s345
          %347 = dma.done %s343, 128
        $region52: #{tpu_custom_call.1} parent=47 // pred_fallthru
          _
      $region48: #{tpu_custom_call.1} parent=5 // pred_fallthru
        _
    $region6: #{tpu_custom_call.1} parent=1 // loop_footer
      %s21 = sadd.s32 1, %s17
    $region7: #{tpu_custom_call.1} parent=1 // loop_footer_branch
      %16 = sbr.rel target = $region3
    $region8: #{tpu_custom_call.1} parent=1 // loop_exit
      _
    %348 = vsyncpa [#allocation3], 1
    %s349 = scalar_lea.sflag [#allocation3], 1
    %350 = vsyncpa %s349, 1
    %351 = vsyncpa [#allocation6], 1
    %s352 = scalar_lea.sflag [#allocation6], 1
    %353 = vsyncpa %s352, 1
    %354 = vsyncpa [#allocation4], 1
    %s355 = scalar_lea.sflag [#allocation4], 1
    %356 = vsyncpa %s355, 1

</llo_original>
